<compile_context>
chip_gen: v5e
topology: v5e:2x2
jax: 0.10.0
libtpu: 0.0.40
codegen_flags: <defaults>
</compile_context>

<pallas_src>
import functools

import jax
import jax.numpy as jnp
from jax.experimental import pallas as pl
from jax.experimental.pallas import tpu as pltpu


def _relu_linear_relu_kernel(x_ref, w_ref, b_ref, o_ref, acc_ref, *,
                             use_bf16_operands: bool):
    k = pl.program_id(2)

    @pl.when(k == 0)
    def _():
        acc_ref[...] = jnp.zeros_like(acc_ref)

    # Input ReLU fused on the A tile (elementwise, safe per-K-slice).
    xk = jnp.maximum(x_ref[...], 0.0)
    wk = w_ref[...]
    if use_bf16_operands:
        # Halves MXU operand width / DMA bytes on v6e/v7x; keep f32 accumulation.
        xk = xk.astype(jnp.bfloat16)
        wk = wk.astype(jnp.bfloat16)
    acc_ref[...] += jnp.dot(xk, wk, preferred_element_type=jnp.float32)

    @pl.when(k == pl.num_programs(2) - 1)
    def _():
        # Bias + output ReLU only in the finalize branch (once per (i, j) tile).
        y = acc_ref[...] + b_ref[...]           # b_ref is (1, tn), broadcasts over rows
        o_ref[...] = jnp.maximum(y, 0.0).astype(o_ref.dtype)


def _round_up(x: int, m: int) -> int:
    return ((x + m - 1) // m) * m


def utterance_identity(x, w, b, *,
                       tm_target: int = 256,
                       tn_target: int = 512,
                       tk_target: int = 512,
                       use_bf16_operands: bool = False):
    """y = relu(relu(x) @ w + b).

    x: [B, H] f32, w: [H, O] f32 (transposed from PyTorch's [O, H]), b: [O] f32.
    Returns [B, O] f32.
    """
    B, H = x.shape
    H2, O = w.shape
    assert H == H2 and b.shape == (O,)

    # Clamp tile sizes for small problems, keep (8, 128) alignment.
    tm = tm_target if B >= tm_target else _round_up(B, 8)
    tk = tk_target if H >= tk_target else _round_up(H, 128)
    tn = tn_target if O >= tn_target else _round_up(O, 128)

    # Pad to lane/sublane-dense multiples of the tile sizes.
    Bp = _round_up(B, tm)
    Hp = _round_up(H, tk)
    Op = _round_up(O, tn)

    xp = x if (Bp == B and Hp == H) else jnp.pad(x, ((0, Bp - B), (0, Hp - H)))
    wp = w if (Hp == H and Op == O) else jnp.pad(w, ((0, Hp - H), (0, Op - O)))
    bp = (b if Op == O else jnp.pad(b, (0, Op - O))).reshape(1, Op)

    grid = (Bp // tm, Op // tn, Hp // tk)

    flops = 2 * Bp * Hp * Op
    bytes_accessed = 4 * (Bp * Hp + Hp * Op + Op + Bp * Op)

    kernel = functools.partial(_relu_linear_relu_kernel,
                               use_bf16_operands=use_bf16_operands)

    out = pl.pallas_call(
        kernel,
        out_shape=jax.ShapeDtypeStruct((Bp, Op), x.dtype),
        grid=grid,
        in_specs=[
            pl.BlockSpec((tm, tk), lambda i, j, k: (i, k)),   # x tile
            pl.BlockSpec((tk, tn), lambda i, j, k: (k, j)),   # W tile
            pl.BlockSpec((1, tn), lambda i, j, k: (0, j)),    # bias tile
        ],
        out_specs=pl.BlockSpec((tm, tn), lambda i, j, k: (i, j)),
        scratch_shapes=[pltpu.VMEM((tm, tn), jnp.float32)],
        compiler_params=pltpu.CompilerParams(
            dimension_semantics=("parallel", "parallel", "arbitrary")),
        cost_estimate=pl.CostEstimate(flops=flops,
                                      transcendentals=0,
                                      bytes_accessed=bytes_accessed),
    )(xp, wp, bp)

    return out[:B, :O]


if __name__ == "__main__":
    key = jax.random.PRNGKey(0)
    kx, kw, kb = jax.random.split(key, 3)

    # Small shapes consistent with the module's utterance vector [B, H].
    B, input_dim, out_dim = 8, 32, 32

    x = jax.random.normal(kx, (B, input_dim), dtype=jnp.float32)
    # PyTorch nn.Linear stores weight as [out, in]; the kernel takes [in, out].
    w_torch_layout = jax.random.normal(kw, (out_dim, input_dim), dtype=jnp.float32) * 0.1
    b = jax.random.normal(kb, (out_dim,), dtype=jnp.float32) * 0.1
    w = w_torch_layout.T  # [H, O]

    y = utterance_identity(x, w, b)
    jax.block_until_ready(y)

    # Pure-JAX reference.
    ref = jnp.maximum(jnp.maximum(x, 0.0) @ w + b, 0.0)
    assert y.shape == ref.shape
    assert jnp.allclose(y, ref, atol=1e-5, rtol=1e-5), "mismatch vs reference"

    print("KERNEL_OK")
</pallas_src>

<mosaic_0001>
module attributes {stable_mosaic.version = 11 : i64} {
  func.func @_relu_linear_relu_kernel(%arg0: i32, %arg1: i32, %arg2: i32, %arg3: memref<8x128xf32, #tpu.memory_space<vmem>>, %arg4: memref<128x128xf32, #tpu.memory_space<vmem>>, %arg5: memref<1x128xf32, #tpu.memory_space<vmem>>, %arg6: memref<8x128xf32, #tpu.memory_space<vmem>>, %arg7: memref<8x128xf32, #tpu.memory_space<vmem>>) attributes {dimension_semantics = [#tpu.dimension_semantics<parallel>, #tpu.dimension_semantics<parallel>, #tpu.dimension_semantics<arbitrary>], iteration_bounds = array<i64: 1, 1, 1>, scalar_prefetch = 0 : i64, scratch_operands = 1 : i64, tpu.core_type = #tpu.core_type<tc>, window_params = [{transform_indices = @transform_0, window_bounds = array<i64: 8, 128>}, {transform_indices = @transform_1, window_bounds = array<i64: 128, 128>}, {transform_indices = @transform_2, window_bounds = array<i64: 1, 128>}, {transform_indices = @transform_3, window_bounds = array<i64: 8, 128>}]} {
    %c0_i32 = arith.constant 0 : i32
    %0 = arith.cmpi eq, %arg2, %c0_i32 : i32
    %1 = arith.extui %0 : i1 to i32
    %c0_i32_0 = arith.constant 0 : i32
    %2 = arith.cmpi ne, %1, %c0_i32_0 : i32
    scf.if %2 {
      %cst_11 = arith.constant 0.000000e+00 : f32
      %14 = vector.broadcast %cst_11 : f32 to vector<8x128xf32>
      %c0_12 = arith.constant 0 : index
      %c0_13 = arith.constant 0 : index
      %15 = vector.load %arg7[%c0_12, %c0_13] : memref<8x128xf32, #tpu.memory_space<vmem>>, vector<8x128xf32>
      tpu.vector_store %arg7[%c0_12, %c0_13], %14 {strides = array<i32>} : memref<8x128xf32, #tpu.memory_space<vmem>>, vector<8x128xf32>,
    } else {
    }
    %c0 = arith.constant 0 : index
    %c0_1 = arith.constant 0 : index
    %3 = vector.load %arg3[%c0, %c0_1] : memref<8x128xf32, #tpu.memory_space<vmem>>, vector<8x128xf32>
    %cst = arith.constant 0.000000e+00 : f32
    %4 = vector.broadcast %cst : f32 to vector<8x128xf32>
    %5 = arith.maximumf %3, %4 : vector<8x128xf32>
    %c0_2 = arith.constant 0 : index
    %c0_3 = arith.constant 0 : index
    %6 = vector.load %arg4[%c0_2, %c0_3] : memref<128x128xf32, #tpu.memory_space<vmem>>, vector<128x128xf32>
    %c0_4 = arith.constant 0 : index
    %c0_5 = arith.constant 0 : index
    %7 = vector.load %arg7[%c0_4, %c0_5] : memref<8x128xf32, #tpu.memory_space<vmem>>, vector<8x128xf32>
    %cst_6 = arith.constant dense<0.000000e+00> : vector<8x128xf32>
    %8 = tpu.matmul %5, %6, %cst_6 {dimension_numbers = #tpu.dot_dimension_numbers<[1], [0], [0], [1], [0, 0, 1, 1], [], []>} : vector<8x128xf32>, vector<128x128xf32>, vector<8x128xf32> -> vector<8x128xf32>
    %9 = arith.addf %7, %8 : vector<8x128xf32>
    %c0_7 = arith.constant 0 : index
    %c0_8 = arith.constant 0 : index
    %10 = vector.load %arg7[%c0_7, %c0_8] : memref<8x128xf32, #tpu.memory_space<vmem>>, vector<8x128xf32>
    tpu.vector_store %arg7[%c0_7, %c0_8], %9 {strides = array<i32>} : memref<8x128xf32, #tpu.memory_space<vmem>>, vector<8x128xf32>,
    %c0_i32_9 = arith.constant 0 : i32
    %11 = arith.cmpi eq, %arg2, %c0_i32_9 : i32
    %12 = arith.extui %11 : i1 to i32
    %c0_i32_10 = arith.constant 0 : i32
    %13 = arith.cmpi ne, %12, %c0_i32_10 : i32
    scf.if %13 {
      %c0_11 = arith.constant 0 : index
      %c0_12 = arith.constant 0 : index
      %14 = vector.load %arg7[%c0_11, %c0_12] : memref<8x128xf32, #tpu.memory_space<vmem>>, vector<8x128xf32>
      %c0_13 = arith.constant 0 : index
      %c0_14 = arith.constant 0 : index
      %15 = vector.load %arg5[%c0_13, %c0_14] : memref<1x128xf32, #tpu.memory_space<vmem>>, vector<1x128xf32>
      %16 = vector.broadcast %15 : vector<1x128xf32> to vector<8x128xf32>
      %17 = arith.addf %14, %16 : vector<8x128xf32>
      %cst_15 = arith.constant 0.000000e+00 : f32
      %18 = vector.broadcast %cst_15 : f32 to vector<8x128xf32>
      %19 = arith.maximumf %17, %18 : vector<8x128xf32>
      %c0_16 = arith.constant 0 : index
      %c0_17 = arith.constant 0 : index
      %20 = vector.load %arg6[%c0_16, %c0_17] : memref<8x128xf32, #tpu.memory_space<vmem>>, vector<8x128xf32>
      tpu.vector_store %arg6[%c0_16, %c0_17], %19 {strides = array<i32>} : memref<8x128xf32, #tpu.memory_space<vmem>>, vector<8x128xf32>,
    } else {
    }
    return
  }
  func.func @transform_0(%arg0: i32, %arg1: i32, %arg2: i32) -> (i32, i32) {
    %c0_i32 = arith.constant 0 : i32
    return %arg0, %arg2 : i32, i32
  }
  func.func @transform_1(%arg0: i32, %arg1: i32, %arg2: i32) -> (i32, i32) {
    %c0_i32 = arith.constant 0 : i32
    return %arg2, %arg1 : i32, i32
  }
  func.func @transform_2(%arg0: i32, %arg1: i32, %arg2: i32) -> (i32, i32) {
    %c0_i32 = arith.constant 0 : i32
    %c0_i32_0 = arith.constant 0 : i32
    return %c0_i32, %arg1 : i32, i32
  }
  func.func @transform_3(%arg0: i32, %arg1: i32, %arg2: i32) -> (i32, i32) {
    %c0_i32 = arith.constant 0 : i32
    return %arg0, %arg1 : i32, i32
  }
}

</mosaic_0001>

<llo_original>
// kernel: tpu_custom_call.1
$region0: #{tpu_custom_call.1}
  #allocation0 [shape = 'u32[]', space=smem, size = 0x4, offset = 0x4, fixed_abs, tag = 'smem constant byte address 0x4 - core index']
  #allocation1 [shape = 'u32[72,128]{1,0:T(1,128)}', space=vmem, size = 0x9000, scoped, tag = 'internal scratch']
  #allocation2 [shape = 'f32[8,128]{1,0:T(8,128)}', space=vmem, size = 0x1000, scoped, tag = 'scratch operand']
  %s0 = inlined_call_operand.hbm [shape: f32[8,128], index: 0, kind: input, shape index: {}]
  %s1 = inlined_call_operand.hbm [shape: f32[128,128], index: 1, kind: input, shape index: {}]
  %s2 = inlined_call_operand.vmem [shape: f32[1,128], index: 2, kind: input, shape index: {}]
  %s3 = inlined_call_operand.hbm [shape: f32[8,128], index: 3, kind: output, shape index: {}]
  %s4 = sld [smem:[#allocation0]]
  $region38: #{tpu_custom_call.1} parent=0
    _
  %s6 = ssub.s32 1, %s4
  %s7 = scalar_select 0, %s6, %s4
  $region1: #{tpu_custom_call.1} parent=0
    #allocation3 [shape = 'u8[4096]{0}', space=vmem, size = 0x1000, scoped, tag = 'input window, operand 0, single buffered']
    #allocation4 [shape = 's32[1]{0}', space=sflag, size = 0x4, scoped, tag = 'scoped memory for tpu_custom_call.1']
    #allocation5 [shape = 's32[1]{0}', space=sflag, size = 0x4, scoped, tag = 'scoped memory for tpu_custom_call.1']
    #allocation6 [shape = 'u8[65536]{0}', space=vmem, size = 0x10000, scoped, tag = 'input window, operand 1, single buffered']
    #allocation7 [shape = 's32[1]{0}', space=sflag, size = 0x4, scoped, tag = 'scoped memory for tpu_custom_call.1']
    #allocation8 [shape = 'u8[4096]{0}', space=vmem, size = 0x1000, scoped, tag = 'output window, operand 0, single buffered']
    %8 = vsyncpa [#allocation4], 0
    %9 = vsyncpa [#allocation7], 0
    %10 = vsyncpa [#allocation5], 0
    // Predicated region
    $region2: #{tpu_custom_call.1} parent=1 // pred_check
      _
    $region3: #{tpu_custom_call.1} parent=1 // pred_check_branch
      %12 = sbr.rel (0) target = $region5
    $region4: #{tpu_custom_call.1} parent=1 // pred_region
      %14 = vsyncadd [#allocation4], 0
      %s16 = sshll.u32 %s0, 4
      %s17 = int_to_ptr.hbm [resolvable:$true] %s16
      %s18 = sshll.u32 [#allocation3], 4
      %s19 = int_to_ptr.vmem [resolvable:$true] %s18
      %21 = dma.hbm_to_vmem [thread:$0]  %s17, 128, %s19, [#allocation4]
    $region5: #{tpu_custom_call.1} parent=1 // pred_fallthru
      _
    // Predicated region
    $region6: #{tpu_custom_call.1} parent=1 // pred_check
      _
    $region7: #{tpu_custom_call.1} parent=1 // pred_check_branch
      %23 = sbr.rel (0) target = $region9
    $region8: #{tpu_custom_call.1} parent=1 // pred_region
      %25 = vsyncadd [#allocation7], 0
      %s26 = sshll.u32 %s1, 4
      %s27 = int_to_ptr.hbm [resolvable:$true] %s26
      %s28 = sshll.u32 [#allocation6], 4
      %s29 = int_to_ptr.vmem [resolvable:$true] %s28
      %34 = dma.hbm_to_vmem [thread:$0]  %s27, 2048, %s29, [#allocation7], 128, 128, 8
    $region9: #{tpu_custom_call.1} parent=1 // pred_fallthru
      _
    // Predicated region
    $region10: #{tpu_custom_call.1} parent=1 // pred_check
      _
    $region11: #{tpu_custom_call.1} parent=1 // pred_check_branch
      %36 = sbr.rel (0) target = $region13
    $region12: #{tpu_custom_call.1} parent=1 // pred_region
      _
    $region13: #{tpu_custom_call.1} parent=1 // pred_fallthru
      _
    // Predicated region
    $region14: #{tpu_custom_call.1} parent=1 // pred_check
      _
    $region15: #{tpu_custom_call.1} parent=1 // pred_check_branch
      %38 = sbr.rel (0) target = $region17
    $region16: #{tpu_custom_call.1} parent=1 // pred_region
      %40 = dma.done [#allocation4], 128
    $region17: #{tpu_custom_call.1} parent=1 // pred_fallthru
      _
    // Predicated region
    $region18: #{tpu_custom_call.1} parent=1 // pred_check
      _
    $region19: #{tpu_custom_call.1} parent=1 // pred_check_branch
      %42 = sbr.rel (0) target = $region21
    $region20: #{tpu_custom_call.1} parent=1 // pred_region
      %44 = dma.done [#allocation7], 2048
    $region21: #{tpu_custom_call.1} parent=1 // pred_fallthru
      _
    %p45 = scmp.eq.s32.totalorder 0, 0
    // Predicated region
    $region22: #{tpu_custom_call.1} parent=1 // pred_check
      %p46 = pneg %p45
    $region23: #{tpu_custom_call.1} parent=1 // pred_check_branch
      %48 = sbr.rel (%p46) target = $region25
    $region24: #{tpu_custom_call.1} parent=1 // pred_region
      %49 = vst [vmem:[#allocation2] sm:$0xff] 0.0
    $region25: #{tpu_custom_call.1} parent=1 // pred_fallthru
      _
    %v50 = vld [vmem:[#allocation3] sm:$0xff]
    %v51 = vmax.f32 %v50, 0.0
    %v52 = vld [vmem:[#allocation6] sm:$0xff]
    %v53 = vld [vmem:[#allocation6 + $0x8] sm:$0xff]
    %v54 = vld [vmem:[#allocation6 + $0x10] sm:$0xff]
    %v55 = vld [vmem:[#allocation6 + $0x18] sm:$0xff]
    %v56 = vld [vmem:[#allocation6 + $0x20] sm:$0xff]
    %v57 = vld [vmem:[#allocation6 + $0x28] sm:$0xff]
    %v58 = vld [vmem:[#allocation6 + $0x30] sm:$0xff]
    %v59 = vld [vmem:[#allocation6 + $0x38] sm:$0xff]
    %v60 = vld [vmem:[#allocation6 + $0x40] sm:$0xff]
    %v61 = vld [vmem:[#allocation6 + $0x48] sm:$0xff]
    %v62 = vld [vmem:[#allocation6 + $0x50] sm:$0xff]
    %v63 = vld [vmem:[#allocation6 + $0x58] sm:$0xff]
    %v64 = vld [vmem:[#allocation6 + $0x60] sm:$0xff]
    %v65 = vld [vmem:[#allocation6 + $0x68] sm:$0xff]
    %v66 = vld [vmem:[#allocation6 + $0x70] sm:$0xff]
    %v67 = vld [vmem:[#allocation6 + $0x78] sm:$0xff]
    %v68 = vld [vmem:[#allocation2] sm:$0xff]
    %69 = vmatpush.msra.mxu0 %v67
    %70 = vmatpush.msra.mxu0 %v66
    %71 = vmatpush.msra.mxu0 %v65
    %72 = vmatpush.msra.mxu0 %v64
    %73 = vmatpush.msra.mxu0 %v63
    %74 = vmatpush.msra.mxu0 %v62
    %75 = vmatpush.msra.mxu0 %v61
    %76 = vmatpush.msra.mxu0 %v60
    %77 = vmatpush.msra.mxu0 %v59
    %78 = vmatpush.msra.mxu0 %v58
    %79 = vmatpush.msra.mxu0 %v57
    %80 = vmatpush.msra.mxu0 %v56
    %81 = vmatpush.msra.mxu0 %v55
    %82 = vmatpush.msra.mxu0 %v54
    %83 = vmatpush.msra.mxu0 %v53
    %84 = vmatpush.msra.mxu0 %v52
    %85 = vmatmul.f32.gmra.mxu0 %v51
    %v86 = vpop.f32.mrf.mxu0
    %v87 = vadd.f32 0.0, %v86
    %88 = vdwg.mxu0
    %v89 = vadd.f32 %v68, %v87
    %90 = vst [vmem:[#allocation2] sm:$0xff] %v89
    // Predicated region
    $region26: #{tpu_custom_call.1} parent=1 // pred_check
      %p91 = pneg %p45
    $region27: #{tpu_custom_call.1} parent=1 // pred_check_branch
      %93 = sbr.rel (%p91) target = $region29
    $region28: #{tpu_custom_call.1} parent=1 // pred_region
      %v94 = vld [vmem:[#allocation2] sm:$0xff]
      %v95 = vld [vmem:[%s2] sm:$0x1]
      %v97 = vperm.slane %v95, 0
      %v99 = vadd.f32 %v94, %v97
      %v100 = vmax.f32 %v99, 0.0
      %101 = vst [vmem:[#allocation8] sm:$0xff] %v100
    $region29: #{tpu_custom_call.1} parent=1 // pred_fallthru
      _
    // Predicated region
    $region30: #{tpu_custom_call.1} parent=1 // pred_check
      _
    $region31: #{tpu_custom_call.1} parent=1 // pred_check_branch
      %103 = sbr.rel (0) target = $region33
    $region32: #{tpu_custom_call.1} parent=1 // pred_region
      %105 = vsyncadd [#allocation5], 0
      %s107 = sshll.u32 [#allocation8], 4
      %s108 = int_to_ptr.vmem [resolvable:$true] %s107
      %s109 = sshll.u32 %s3, 4
      %s110 = int_to_ptr.hbm [resolvable:$true] %s109
      %112 = dma.vmem_to_hbm [thread:$0]  %s108, 128, %s110, [#allocation5]
    $region33: #{tpu_custom_call.1} parent=1 // pred_fallthru
      _
    // Predicated region
    $region34: #{tpu_custom_call.1} parent=1 // pred_check
      _
    $region35: #{tpu_custom_call.1} parent=1 // pred_check_branch
      %114 = sbr.rel (0) target = $region37
    $region36: #{tpu_custom_call.1} parent=1 // pred_region
      %116 = dma.done [#allocation5], 128
    $region37: #{tpu_custom_call.1} parent=1 // pred_fallthru
      _
    %117 = vsyncpa [#allocation4], 1
    %118 = vsyncpa [#allocation7], 1
    %119 = vsyncpa [#allocation5], 1

</llo_original>
